<compile_context>
chip_gen: v7x
topology: tpu7x:2x2x1
jax: 0.10.0
libtpu: 0.0.40
codegen_flags: <defaults>
</compile_context>

<pallas_src>
import functools

import jax
import jax.numpy as jnp
from jax import lax
from jax.experimental import pallas as pl
from jax.experimental.pallas import tpu as pltpu


def _round_up(x, m):
    return ((x + m - 1) // m) * m


def _softplus(v):
    # torch.nn.Softplus(beta=1, threshold=20): x if x > 20 else log(1 + exp(x)).
    return jnp.where(v > 20.0, v, jnp.log(1.0 + jnp.exp(jnp.minimum(v, 20.0))))


def _mix32(a):
    # Cheap xorshift-multiply integer mixer (int32 arithmetic wraps mod 2**32).
    a = a ^ (a >> 16)
    a = a * jnp.int32(0x7FEB352D)
    a = a ^ (a >> 15)
    a = a * jnp.int32(0x3243F6A9)
    a = a ^ (a >> 16)
    return a


def _mlp_kernel(seed_ref,
                x_ref,
                w1_ref, b1_ref,
                w2_ref, b2_ref,
                w3_ref, b3_ref,
                w4_ref, b4_ref,
                out_ref,
                *, drop_p, var_scale, mxu_dtype):
    """Full forward pass on one (features, TB) batch tile (batch on lanes)."""
    seed = seed_ref[0]
    tb = out_ref.shape[-1]
    col0 = pl.program_id(0) * tb                       # global column offset of this tile
    thresh = jnp.int32(int(round(drop_p * (1 << 24))))  # integer dropout threshold
    inv_keep = jnp.float32(1.0 / (1.0 - drop_p)) if drop_p > 0.0 else jnp.float32(1.0)

    def dropout(v, salt):
        # MC dropout: always active (inverted dropout, keep prob 1-p).
        if drop_p == 0.0:
            return v
        rows = lax.broadcasted_iota(jnp.int32, v.shape, 0)
        cols = lax.broadcasted_iota(jnp.int32, v.shape, 1) + col0
        a = _mix32((cols + jnp.int32(salt) * jnp.int32(0x01000193)) ^ seed)
        a = _mix32(a + rows * jnp.int32(0x27D4EB2F))
        keep = (a & jnp.int32(0x00FFFFFF)) >= thresh     # uniform 24-bit vs threshold
        return jnp.where(keep, v * inv_keep, 0.0)

    def dense(w_ref, b_ref, h):
        # W is (out, in) -- native nn.Linear layout; f32 accumulation on the MXU.
        return jnp.dot(w_ref[...], h.astype(mxu_dtype),
                       preferred_element_type=jnp.float32) + b_ref[...]

    h = x_ref[...]                                      # (F, TB)
    h = dropout(_softplus(dense(w1_ref, b1_ref, h)), 1)  # (H1, TB)
    h = dropout(_softplus(dense(w2_ref, b2_ref, h)), 2)  # (H2, TB)
    h = dropout(_softplus(dense(w3_ref, b3_ref, h)), 3)  # (H3, TB)
    o = dense(w4_ref, b4_ref, h)                        # (2, TB): row0=loc, row1=pre-scale

    is_loc = lax.broadcasted_iota(jnp.int32, o.shape, 0) == 0
    out_ref[...] = jnp.where(is_loc, o, (_softplus(o) + 1e-6) * var_scale)


def prob_mc_dropout_dnn_3l(x, params, seed, *, drop_p=0.005, var_scale=1.0,
                           mc_samples=1, block_b=512, mxu_dtype=jnp.float32):
    """Returns (loc, scale) of the predictive Normal distribution.

    `mc_samples > 1` folds that many stochastic MC-dropout forward passes into
    a single pallas_call (samples stacked on the batch/lane axis; each sample
    gets an independent dropout mask). Set mxu_dtype=jnp.bfloat16 on v6e/v7x
    for bf16 MXU inputs with f32 accumulation.
    """
    x = jnp.asarray(x, jnp.float32)
    B, F = x.shape
    w1, b1, w2, b2, w3, b3, w4, b4 = params  # torch layout: w_i (out, in), b_i (out,)
    H1, H2, H3 = w1.shape[0], w2.shape[0], w3.shape[0]

    # Fold MC samples into the batch axis and go batch-on-lanes: (F, n).
    n = B * mc_samples
    xt = jnp.tile(x, (mc_samples, 1)).T

    assert block_b % 128 == 0
    n_pad = _round_up(n, 128)
    tb = n_pad if n_pad <= block_b else block_b
    n_pad = _round_up(n_pad, tb)
    xt = jnp.pad(xt, ((0, 0), (0, n_pad - n))).astype(mxu_dtype)

    kernel = functools.partial(_mlp_kernel, drop_p=float(drop_p),
                               var_scale=float(var_scale), mxu_dtype=mxu_dtype)

    def resident(shape):
        # Whole-array block; index_map is constant so the block is fetched once
        # and stays VMEM-resident across all grid steps.
        return pl.BlockSpec(shape, lambda i, s: (0, 0))

    out = pl.pallas_call(
        kernel,
        out_shape=jax.ShapeDtypeStruct((2, n_pad), jnp.float32),
        grid_spec=pltpu.PrefetchScalarGridSpec(
            num_scalar_prefetch=1,                      # seed lives in SMEM
            grid=(n_pad // tb,),                        # batch / MC-sample tiles
            in_specs=[
                pl.BlockSpec((F, tb), lambda i, s: (0, i)),   # x tile (streamed)
                resident((H1, F)), resident((H1, 1)),
                resident((H2, H1)), resident((H2, 1)),
                resident((H3, H2)), resident((H3, 1)),
                resident((2, H3)), resident((2, 1)),
            ],
            out_specs=pl.BlockSpec((2, tb), lambda i, s: (0, i)),  # lane-dense
        ),
        compiler_params=pltpu.CompilerParams(
            dimension_semantics=("parallel",)),          # tiles independent -> 2 TCs on v7x
    )(
        jnp.asarray([seed], dtype=jnp.int32),
        xt,
        w1.astype(mxu_dtype), b1.reshape(-1, 1).astype(jnp.float32),
        w2.astype(mxu_dtype), b2.reshape(-1, 1).astype(jnp.float32),
        w3.astype(mxu_dtype), b3.reshape(-1, 1).astype(jnp.float32),
        w4.astype(mxu_dtype), b4.reshape(-1, 1).astype(jnp.float32),
    )

    loc = out[0, :n].reshape(mc_samples, B)
    scale = out[1, :n].reshape(mc_samples, B)
    if mc_samples == 1:
        loc, scale = loc[0], scale[0]
    # NOTE: matches torch's x[:, 0:1].squeeze() for B > 1; for B == 1 torch
    # would return a 0-d tensor, here we keep shape (1,).
    return loc, scale


def init_params(key, input_size, h1=50, h2=50, h3=20):
    """nn.Linear-style init: U(-1/sqrt(fan_in), 1/sqrt(fan_in)), torch (out, in) layout."""
    dims = [(h1, input_size), (h2, h1), (h3, h2), (2, h3)]
    params = []
    for (fan_out, fan_in) in dims:
        key, kw, kb = jax.random.split(key, 3)
        bound = 1.0 / float(fan_in) ** 0.5
        w = jax.random.uniform(kw, (fan_out, fan_in), jnp.float32, -bound, bound)
        b = jax.random.uniform(kb, (fan_out,), jnp.float32, -bound, bound)
        params += [w, b]
    return tuple(params)


if __name__ == "__main__":
    key = jax.random.PRNGKey(0)
    k_x, k_p = jax.random.split(key)

    batch, input_size = 8, 16
    x = jax.random.normal(k_x, (batch, input_size), jnp.float32)
    params = init_params(k_p, input_size, h1=50, h2=50, h3=20)

    # Single stochastic forward pass (== module.forward under MC dropout).
    loc, scale = prob_mc_dropout_dnn_3l(x, params, seed=1234,
                                        drop_p=0.005, var_scale=1.0)
    loc = jax.block_until_ready(loc)
    scale = jax.block_until_ready(scale)
    assert loc.shape == (batch,) and scale.shape == (batch,)
    assert bool(jnp.all(jnp.isfinite(loc))) and bool(jnp.all(scale > 0.0))

    # Four MC-dropout samples folded into ONE pallas_call (same padded shapes,
    # so the same compiled kernel is reused); each sample has its own mask.
    loc_mc, scale_mc = prob_mc_dropout_dnn_3l(x, params, seed=1234,
                                              drop_p=0.005, var_scale=1.0,
                                              mc_samples=4)
    loc_mc = jax.block_until_ready(loc_mc)
    scale_mc = jax.block_until_ready(scale_mc)
    assert loc_mc.shape == (4, batch) and scale_mc.shape == (4, batch)
    assert bool(jnp.all(jnp.isfinite(loc_mc))) and bool(jnp.all(scale_mc > 0.0))

    print("KERNEL_OK")
</pallas_src>

<mosaic_0001>
module attributes {stable_mosaic.version = 11 : i64} {
  func.func @_mlp_kernel(%arg0: i32, %arg1: memref<1xi32, #tpu.memory_space<smem>>, %arg2: memref<16x128xf32, #tpu.memory_space<vmem>>, %arg3: memref<50x16xf32, #tpu.memory_space<vmem>>, %arg4: memref<50x1xf32, #tpu.memory_space<vmem>>, %arg5: memref<50x50xf32, #tpu.memory_space<vmem>>, %arg6: memref<50x1xf32, #tpu.memory_space<vmem>>, %arg7: memref<20x50xf32, #tpu.memory_space<vmem>>, %arg8: memref<20x1xf32, #tpu.memory_space<vmem>>, %arg9: memref<2x20xf32, #tpu.memory_space<vmem>>, %arg10: memref<2x1xf32, #tpu.memory_space<vmem>>, %arg11: memref<2x128xf32, #tpu.memory_space<vmem>>) attributes {dimension_semantics = [#tpu.dimension_semantics<parallel>], iteration_bounds = array<i64: 1>, scalar_prefetch = 1 : i64, scratch_operands = 0 : i64, tpu.core_type = #tpu.core_type<tc>, window_params = [{transform_indices = @transform_0, window_bounds = array<i64: 16, 128>}, {pipeline_mode = #tpu.pipeline_mode<synchronous>, transform_indices = @transform_1, window_bounds = array<i64: 50, 16>}, {pipeline_mode = #tpu.pipeline_mode<synchronous>, transform_indices = @transform_2, window_bounds = array<i64: 50, 1>}, {pipeline_mode = #tpu.pipeline_mode<synchronous>, transform_indices = @transform_3, window_bounds = array<i64: 50, 50>}, {pipeline_mode = #tpu.pipeline_mode<synchronous>, transform_indices = @transform_4, window_bounds = array<i64: 50, 1>}, {pipeline_mode = #tpu.pipeline_mode<synchronous>, transform_indices = @transform_5, window_bounds = array<i64: 20, 50>}, {pipeline_mode = #tpu.pipeline_mode<synchronous>, transform_indices = @transform_6, window_bounds = array<i64: 20, 1>}, {pipeline_mode = #tpu.pipeline_mode<synchronous>, transform_indices = @transform_7, window_bounds = array<i64: 2, 20>}, {pipeline_mode = #tpu.pipeline_mode<synchronous>, transform_indices = @transform_8, window_bounds = array<i64: 2, 1>}, {transform_indices = @transform_9, window_bounds = array<i64: 2, 128>}]} {
    %c0 = arith.constant 0 : index
    %0 = memref.load %arg1[%c0] : memref<1xi32, #tpu.memory_space<smem>>
    %c128_i32 = arith.constant 128 : i32
    %1 = arith.muli %arg0, %c128_i32 : i32
    %c0_0 = arith.constant 0 : index
    %c0_1 = arith.constant 0 : index
    %2 = vector.load %arg2[%c0_0, %c0_1] : memref<16x128xf32, #tpu.memory_space<vmem>>, vector<16x128xf32>
    %c0_2 = arith.constant 0 : index
    %c0_3 = arith.constant 0 : index
    %3 = vector.load %arg3[%c0_2, %c0_3] : memref<50x16xf32, #tpu.memory_space<vmem>>, vector<50x16xf32>
    %cst = arith.constant dense<0.000000e+00> : vector<50x128xf32>
    %4 = tpu.matmul %3, %2, %cst {dimension_numbers = #tpu.dot_dimension_numbers<[1], [0], [0], [1], [0, 0, 1, 1], [], []>} : vector<50x16xf32>, vector<16x128xf32>, vector<50x128xf32> -> vector<50x128xf32>
    %c0_4 = arith.constant 0 : index
    %c0_5 = arith.constant 0 : index
    %5 = vector.load %arg4[%c0_4, %c0_5] : memref<50x1xf32, #tpu.memory_space<vmem>>, vector<50x1xf32>
    %6 = vector.broadcast %5 : vector<50x1xf32> to vector<50x128xf32>
    %7 = arith.addf %4, %6 : vector<50x128xf32>
    %cst_6 = arith.constant 2.000000e+01 : f32
    %8 = vector.broadcast %cst_6 : f32 to vector<50x128xf32>
    %9 = arith.cmpf ogt, %7, %8 : vector<50x128xf32>
    %cst_7 = arith.constant 2.000000e+01 : f32
    %10 = vector.broadcast %cst_7 : f32 to vector<50x128xf32>
    %11 = arith.minimumf %7, %10 : vector<50x128xf32>
    %12 = math.exp %11 : vector<50x128xf32>
    %cst_8 = arith.constant 1.000000e+00 : f32
    %13 = vector.broadcast %cst_8 : f32 to vector<50x128xf32>
    %14 = arith.addf %13, %12 : vector<50x128xf32>
    %15 = math.log %14 : vector<50x128xf32>
    %16 = arith.select %9, %7, %15 : vector<50x128xi1>, vector<50x128xf32>
    %17 = tpu.iota {dimensions = array<i32: 0>} : vector<50x128xi32>
    %18 = tpu.iota {dimensions = array<i32: 1>} : vector<50x128xi32>
    %19 = vector.broadcast %1 : i32 to vector<50x128xi32>
    %20 = arith.addi %18, %19 : vector<50x128xi32>
    %c1_i32 = arith.constant 1 : i32
    %c16777619_i32 = arith.constant 16777619 : i32
    %21 = arith.muli %c1_i32, %c16777619_i32 : i32
    %22 = vector.broadcast %21 : i32 to vector<50x128xi32>
    %23 = arith.addi %20, %22 : vector<50x128xi32>
    %24 = vector.broadcast %0 : i32 to vector<50x128xi32>
    %25 = arith.xori %23, %24 : vector<50x128xi32>
    %c16_i32 = arith.constant 16 : i32
    %26 = vector.broadcast %c16_i32 : i32 to vector<50x128xi32>
    %27 = arith.shrsi %25, %26 : vector<50x128xi32>
    %28 = arith.xori %25, %27 : vector<50x128xi32>
    %c2146121005_i32 = arith.constant 2146121005 : i32
    %29 = vector.broadcast %c2146121005_i32 : i32 to vector<50x128xi32>
    %30 = arith.muli %28, %29 : vector<50x128xi32>
    %c15_i32 = arith.constant 15 : i32
    %31 = vector.broadcast %c15_i32 : i32 to vector<50x128xi32>
    %32 = arith.shrsi %30, %31 : vector<50x128xi32>
    %33 = arith.xori %30, %32 : vector<50x128xi32>
    %c843314857_i32 = arith.constant 843314857 : i32
    %34 = vector.broadcast %c843314857_i32 : i32 to vector<50x128xi32>
    %35 = arith.muli %33, %34 : vector<50x128xi32>
    %c16_i32_9 = arith.constant 16 : i32
    %36 = vector.broadcast %c16_i32_9 : i32 to vector<50x128xi32>
    %37 = arith.shrsi %35, %36 : vector<50x128xi32>
    %38 = arith.xori %35, %37 : vector<50x128xi32>
    %c668265263_i32 = arith.constant 668265263 : i32
    %39 = vector.broadcast %c668265263_i32 : i32 to vector<50x128xi32>
    %40 = arith.muli %17, %39 : vector<50x128xi32>
    %41 = arith.addi %38, %40 : vector<50x128xi32>
    %c16_i32_10 = arith.constant 16 : i32
    %42 = vector.broadcast %c16_i32_10 : i32 to vector<50x128xi32>
    %43 = arith.shrsi %41, %42 : vector<50x128xi32>
    %44 = arith.xori %41, %43 : vector<50x128xi32>
    %c2146121005_i32_11 = arith.constant 2146121005 : i32
    %45 = vector.broadcast %c2146121005_i32_11 : i32 to vector<50x128xi32>
    %46 = arith.muli %44, %45 : vector<50x128xi32>
    %c15_i32_12 = arith.constant 15 : i32
    %47 = vector.broadcast %c15_i32_12 : i32 to vector<50x128xi32>
    %48 = arith.shrsi %46, %47 : vector<50x128xi32>
    %49 = arith.xori %46, %48 : vector<50x128xi32>
    %c843314857_i32_13 = arith.constant 843314857 : i32
    %50 = vector.broadcast %c843314857_i32_13 : i32 to vector<50x128xi32>
    %51 = arith.muli %49, %50 : vector<50x128xi32>
    %c16_i32_14 = arith.constant 16 : i32
    %52 = vector.broadcast %c16_i32_14 : i32 to vector<50x128xi32>
    %53 = arith.shrsi %51, %52 : vector<50x128xi32>
    %54 = arith.xori %51, %53 : vector<50x128xi32>
    %c16777215_i32 = arith.constant 16777215 : i32
    %55 = vector.broadcast %c16777215_i32 : i32 to vector<50x128xi32>
    %56 = arith.andi %54, %55 : vector<50x128xi32>
    %c83886_i32 = arith.constant 83886 : i32
    %57 = vector.broadcast %c83886_i32 : i32 to vector<50x128xi32>
    %58 = arith.cmpi sge, %56, %57 : vector<50x128xi32>
    %cst_15 = arith.constant 1.00502515 : f32
    %59 = vector.broadcast %cst_15 : f32 to vector<50x128xf32>
    %60 = arith.mulf %16, %59 : vector<50x128xf32>
    %cst_16 = arith.constant 0.000000e+00 : f32
    %61 = vector.broadcast %cst_16 : f32 to vector<50x128xf32>
    %62 = arith.select %58, %60, %61 : vector<50x128xi1>, vector<50x128xf32>
    %c0_17 = arith.constant 0 : index
    %c0_18 = arith.constant 0 : index
    %63 = vector.load %arg5[%c0_17, %c0_18] : memref<50x50xf32, #tpu.memory_space<vmem>>, vector<50x50xf32>
    %cst_19 = arith.constant dense<0.000000e+00> : vector<50x128xf32>
    %64 = tpu.matmul %63, %62, %cst_19 {dimension_numbers = #tpu.dot_dimension_numbers<[1], [0], [0], [1], [0, 0, 1, 1], [], []>} : vector<50x50xf32>, vector<50x128xf32>, vector<50x128xf32> -> vector<50x128xf32>
    %c0_20 = arith.constant 0 : index
    %c0_21 = arith.constant 0 : index
    %65 = vector.load %arg6[%c0_20, %c0_21] : memref<50x1xf32, #tpu.memory_space<vmem>>, vector<50x1xf32>
    %66 = vector.broadcast %65 : vector<50x1xf32> to vector<50x128xf32>
    %67 = arith.addf %64, %66 : vector<50x128xf32>
    %cst_22 = arith.constant 2.000000e+01 : f32
    %68 = vector.broadcast %cst_22 : f32 to vector<50x128xf32>
    %69 = arith.cmpf ogt, %67, %68 : vector<50x128xf32>
    %cst_23 = arith.constant 2.000000e+01 : f32
    %70 = vector.broadcast %cst_23 : f32 to vector<50x128xf32>
    %71 = arith.minimumf %67, %70 : vector<50x128xf32>
    %72 = math.exp %71 : vector<50x128xf32>
    %cst_24 = arith.constant 1.000000e+00 : f32
    %73 = vector.broadcast %cst_24 : f32 to vector<50x128xf32>
    %74 = arith.addf %73, %72 : vector<50x128xf32>
    %75 = math.log %74 : vector<50x128xf32>
    %76 = arith.select %69, %67, %75 : vector<50x128xi1>, vector<50x128xf32>
    %77 = tpu.iota {dimensions = array<i32: 0>} : vector<50x128xi32>
    %78 = tpu.iota {dimensions = array<i32: 1>} : vector<50x128xi32>
    %79 = vector.broadcast %1 : i32 to vector<50x128xi32>
    %80 = arith.addi %78, %79 : vector<50x128xi32>
    %c2_i32 = arith.constant 2 : i32
    %c16777619_i32_25 = arith.constant 16777619 : i32
    %81 = arith.muli %c2_i32, %c16777619_i32_25 : i32
    %82 = vector.broadcast %81 : i32 to vector<50x128xi32>
    %83 = arith.addi %80, %82 : vector<50x128xi32>
    %84 = vector.broadcast %0 : i32 to vector<50x128xi32>
    %85 = arith.xori %83, %84 : vector<50x128xi32>
    %c16_i32_26 = arith.constant 16 : i32
    %86 = vector.broadcast %c16_i32_26 : i32 to vector<50x128xi32>
    %87 = arith.shrsi %85, %86 : vector<50x128xi32>
    %88 = arith.xori %85, %87 : vector<50x128xi32>
    %c2146121005_i32_27 = arith.constant 2146121005 : i32
    %89 = vector.broadcast %c2146121005_i32_27 : i32 to vector<50x128xi32>
    %90 = arith.muli %88, %89 : vector<50x128xi32>
    %c15_i32_28 = arith.constant 15 : i32
    %91 = vector.broadcast %c15_i32_28 : i32 to vector<50x128xi32>
    %92 = arith.shrsi %90, %91 : vector<50x128xi32>
    %93 = arith.xori %90, %92 : vector<50x128xi32>
    %c843314857_i32_29 = arith.constant 843314857 : i32
    %94 = vector.broadcast %c843314857_i32_29 : i32 to vector<50x128xi32>
    %95 = arith.muli %93, %94 : vector<50x128xi32>
    %c16_i32_30 = arith.constant 16 : i32
    %96 = vector.broadcast %c16_i32_30 : i32 to vector<50x128xi32>
    %97 = arith.shrsi %95, %96 : vector<50x128xi32>
    %98 = arith.xori %95, %97 : vector<50x128xi32>
    %c668265263_i32_31 = arith.constant 668265263 : i32
    %99 = vector.broadcast %c668265263_i32_31 : i32 to vector<50x128xi32>
    %100 = arith.muli %77, %99 : vector<50x128xi32>
    %101 = arith.addi %98, %100 : vector<50x128xi32>
    %c16_i32_32 = arith.constant 16 : i32
    %102 = vector.broadcast %c16_i32_32 : i32 to vector<50x128xi32>
    %103 = arith.shrsi %101, %102 : vector<50x128xi32>
    %104 = arith.xori %101, %103 : vector<50x128xi32>
    %c2146121005_i32_33 = arith.constant 2146121005 : i32
    %105 = vector.broadcast %c2146121005_i32_33 : i32 to vector<50x128xi32>
    %106 = arith.muli %104, %105 : vector<50x128xi32>
    %c15_i32_34 = arith.constant 15 : i32
    %107 = vector.broadcast %c15_i32_34 : i32 to vector<50x128xi32>
    %108 = arith.shrsi %106, %107 : vector<50x128xi32>
    %109 = arith.xori %106, %108 : vector<50x128xi32>
    %c843314857_i32_35 = arith.constant 843314857 : i32
    %110 = vector.broadcast %c843314857_i32_35 : i32 to vector<50x128xi32>
    %111 = arith.muli %109, %110 : vector<50x128xi32>
    %c16_i32_36 = arith.constant 16 : i32
    %112 = vector.broadcast %c16_i32_36 : i32 to vector<50x128xi32>
    %113 = arith.shrsi %111, %112 : vector<50x128xi32>
    %114 = arith.xori %111, %113 : vector<50x128xi32>
    %c16777215_i32_37 = arith.constant 16777215 : i32
    %115 = vector.broadcast %c16777215_i32_37 : i32 to vector<50x128xi32>
    %116 = arith.andi %114, %115 : vector<50x128xi32>
    %c83886_i32_38 = arith.constant 83886 : i32
    %117 = vector.broadcast %c83886_i32_38 : i32 to vector<50x128xi32>
    %118 = arith.cmpi sge, %116, %117 : vector<50x128xi32>
    %cst_39 = arith.constant 1.00502515 : f32
    %119 = vector.broadcast %cst_39 : f32 to vector<50x128xf32>
    %120 = arith.mulf %76, %119 : vector<50x128xf32>
    %cst_40 = arith.constant 0.000000e+00 : f32
    %121 = vector.broadcast %cst_40 : f32 to vector<50x128xf32>
    %122 = arith.select %118, %120, %121 : vector<50x128xi1>, vector<50x128xf32>
    %c0_41 = arith.constant 0 : index
    %c0_42 = arith.constant 0 : index
    %123 = vector.load %arg7[%c0_41, %c0_42] : memref<20x50xf32, #tpu.memory_space<vmem>>, vector<20x50xf32>
    %cst_43 = arith.constant dense<0.000000e+00> : vector<20x128xf32>
    %124 = tpu.matmul %123, %122, %cst_43 {dimension_numbers = #tpu.dot_dimension_numbers<[1], [0], [0], [1], [0, 0, 1, 1], [], []>} : vector<20x50xf32>, vector<50x128xf32>, vector<20x128xf32> -> vector<20x128xf32>
    %c0_44 = arith.constant 0 : index
    %c0_45 = arith.constant 0 : index
    %125 = vector.load %arg8[%c0_44, %c0_45] : memref<20x1xf32, #tpu.memory_space<vmem>>, vector<20x1xf32>
    %126 = vector.broadcast %125 : vector<20x1xf32> to vector<20x128xf32>
    %127 = arith.addf %124, %126 : vector<20x128xf32>
    %cst_46 = arith.constant 2.000000e+01 : f32
    %128 = vector.broadcast %cst_46 : f32 to vector<20x128xf32>
    %129 = arith.cmpf ogt, %127, %128 : vector<20x128xf32>
    %cst_47 = arith.constant 2.000000e+01 : f32
    %130 = vector.broadcast %cst_47 : f32 to vector<20x128xf32>
    %131 = arith.minimumf %127, %130 : vector<20x128xf32>
    %132 = math.exp %131 : vector<20x128xf32>
    %cst_48 = arith.constant 1.000000e+00 : f32
    %133 = vector.broadcast %cst_48 : f32 to vector<20x128xf32>
    %134 = arith.addf %133, %132 : vector<20x128xf32>
    %135 = math.log %134 : vector<20x128xf32>
    %136 = arith.select %129, %127, %135 : vector<20x128xi1>, vector<20x128xf32>
    %137 = tpu.iota {dimensions = array<i32: 0>} : vector<20x128xi32>
    %138 = tpu.iota {dimensions = array<i32: 1>} : vector<20x128xi32>
    %139 = vector.broadcast %1 : i32 to vector<20x128xi32>
    %140 = arith.addi %138, %139 : vector<20x128xi32>
    %c3_i32 = arith.constant 3 : i32
    %c16777619_i32_49 = arith.constant 16777619 : i32
    %141 = arith.muli %c3_i32, %c16777619_i32_49 : i32
    %142 = vector.broadcast %141 : i32 to vector<20x128xi32>
    %143 = arith.addi %140, %142 : vector<20x128xi32>
    %144 = vector.broadcast %0 : i32 to vector<20x128xi32>
    %145 = arith.xori %143, %144 : vector<20x128xi32>
    %c16_i32_50 = arith.constant 16 : i32
    %146 = vector.broadcast %c16_i32_50 : i32 to vector<20x128xi32>
    %147 = arith.shrsi %145, %146 : vector<20x128xi32>
    %148 = arith.xori %145, %147 : vector<20x128xi32>
    %c2146121005_i32_51 = arith.constant 2146121005 : i32
    %149 = vector.broadcast %c2146121005_i32_51 : i32 to vector<20x128xi32>
    %150 = arith.muli %148, %149 : vector<20x128xi32>
    %c15_i32_52 = arith.constant 15 : i32
    %151 = vector.broadcast %c15_i32_52 : i32 to vector<20x128xi32>
    %152 = arith.shrsi %150, %151 : vector<20x128xi32>
    %153 = arith.xori %150, %152 : vector<20x128xi32>
    %c843314857_i32_53 = arith.constant 843314857 : i32
    %154 = vector.broadcast %c843314857_i32_53 : i32 to vector<20x128xi32>
    %155 = arith.muli %153, %154 : vector<20x128xi32>
    %c16_i32_54 = arith.constant 16 : i32
    %156 = vector.broadcast %c16_i32_54 : i32 to vector<20x128xi32>
    %157 = arith.shrsi %155, %156 : vector<20x128xi32>
    %158 = arith.xori %155, %157 : vector<20x128xi32>
    %c668265263_i32_55 = arith.constant 668265263 : i32
    %159 = vector.broadcast %c668265263_i32_55 : i32 to vector<20x128xi32>
    %160 = arith.muli %137, %159 : vector<20x128xi32>
    %161 = arith.addi %158, %160 : vector<20x128xi32>
    %c16_i32_56 = arith.constant 16 : i32
    %162 = vector.broadcast %c16_i32_56 : i32 to vector<20x128xi32>
    %163 = arith.shrsi %161, %162 : vector<20x128xi32>
    %164 = arith.xori %161, %163 : vector<20x128xi32>
    %c2146121005_i32_57 = arith.constant 2146121005 : i32
    %165 = vector.broadcast %c2146121005_i32_57 : i32 to vector<20x128xi32>
    %166 = arith.muli %164, %165 : vector<20x128xi32>
    %c15_i32_58 = arith.constant 15 : i32
    %167 = vector.broadcast %c15_i32_58 : i32 to vector<20x128xi32>
    %168 = arith.shrsi %166, %167 : vector<20x128xi32>
    %169 = arith.xori %166, %168 : vector<20x128xi32>
    %c843314857_i32_59 = arith.constant 843314857 : i32
    %170 = vector.broadcast %c843314857_i32_59 : i32 to vector<20x128xi32>
    %171 = arith.muli %169, %170 : vector<20x128xi32>
    %c16_i32_60 = arith.constant 16 : i32
    %172 = vector.broadcast %c16_i32_60 : i32 to vector<20x128xi32>
    %173 = arith.shrsi %171, %172 : vector<20x128xi32>
    %174 = arith.xori %171, %173 : vector<20x128xi32>
    %c16777215_i32_61 = arith.constant 16777215 : i32
    %175 = vector.broadcast %c16777215_i32_61 : i32 to vector<20x128xi32>
    %176 = arith.andi %174, %175 : vector<20x128xi32>
    %c83886_i32_62 = arith.constant 83886 : i32
    %177 = vector.broadcast %c83886_i32_62 : i32 to vector<20x128xi32>
    %178 = arith.cmpi sge, %176, %177 : vector<20x128xi32>
    %cst_63 = arith.constant 1.00502515 : f32
    %179 = vector.broadcast %cst_63 : f32 to vector<20x128xf32>
    %180 = arith.mulf %136, %179 : vector<20x128xf32>
    %cst_64 = arith.constant 0.000000e+00 : f32
    %181 = vector.broadcast %cst_64 : f32 to vector<20x128xf32>
    %182 = arith.select %178, %180, %181 : vector<20x128xi1>, vector<20x128xf32>
    %c0_65 = arith.constant 0 : index
    %c0_66 = arith.constant 0 : index
    %183 = vector.load %arg9[%c0_65, %c0_66] : memref<2x20xf32, #tpu.memory_space<vmem>>, vector<2x20xf32>
    %cst_67 = arith.constant dense<0.000000e+00> : vector<2x128xf32>
    %184 = tpu.matmul %183, %182, %cst_67 {dimension_numbers = #tpu.dot_dimension_numbers<[1], [0], [0], [1], [0, 0, 1, 1], [], []>} : vector<2x20xf32>, vector<20x128xf32>, vector<2x128xf32> -> vector<2x128xf32>
    %c0_68 = arith.constant 0 : index
    %c0_69 = arith.constant 0 : index
    %185 = vector.load %arg10[%c0_68, %c0_69] : memref<2x1xf32, #tpu.memory_space<vmem>>, vector<2x1xf32>
    %186 = vector.broadcast %185 : vector<2x1xf32> to vector<2x128xf32>
    %187 = arith.addf %184, %186 : vector<2x128xf32>
    %188 = tpu.iota {dimensions = array<i32: 0>} : vector<2x128xi32>
    %c0_i32 = arith.constant 0 : i32
    %189 = vector.broadcast %c0_i32 : i32 to vector<2x128xi32>
    %190 = arith.cmpi eq, %188, %189 : vector<2x128xi32>
    %cst_70 = arith.constant 2.000000e+01 : f32
    %191 = vector.broadcast %cst_70 : f32 to vector<2x128xf32>
    %192 = arith.cmpf ogt, %187, %191 : vector<2x128xf32>
    %cst_71 = arith.constant 2.000000e+01 : f32
    %193 = vector.broadcast %cst_71 : f32 to vector<2x128xf32>
    %194 = arith.minimumf %187, %193 : vector<2x128xf32>
    %195 = math.exp %194 : vector<2x128xf32>
    %cst_72 = arith.constant 1.000000e+00 : f32
    %196 = vector.broadcast %cst_72 : f32 to vector<2x128xf32>
    %197 = arith.addf %196, %195 : vector<2x128xf32>
    %198 = math.log %197 : vector<2x128xf32>
    %199 = arith.select %192, %187, %198 : vector<2x128xi1>, vector<2x128xf32>
    %cst_73 = arith.constant 9.99999997E-7 : f32
    %200 = vector.broadcast %cst_73 : f32 to vector<2x128xf32>
    %201 = arith.addf %199, %200 : vector<2x128xf32>
    %cst_74 = arith.constant 1.000000e+00 : f32
    %202 = vector.broadcast %cst_74 : f32 to vector<2x128xf32>
    %203 = arith.mulf %201, %202 : vector<2x128xf32>
    %204 = arith.select %190, %187, %203 : vector<2x128xi1>, vector<2x128xf32>
    %c0_75 = arith.constant 0 : index
    %c0_76 = arith.constant 0 : index
    %205 = vector.load %arg11[%c0_75, %c0_76] : memref<2x128xf32, #tpu.memory_space<vmem>>, vector<2x128xf32>
    tpu.vector_store %arg11[%c0_75, %c0_76], %204 {strides = array<i32>} : memref<2x128xf32, #tpu.memory_space<vmem>>, vector<2x128xf32>,
    return
  }
  func.func @transform_0(%arg0: i32, %arg1: memref<1xi32, #tpu.memory_space<smem>>) -> (i32, i32) {
    %c0_i32 = arith.constant 0 : i32
    %c0_i32_0 = arith.constant 0 : i32
    return %c0_i32, %arg0 : i32, i32
  }
  func.func @transform_1(%arg0: i32, %arg1: memref<1xi32, #tpu.memory_space<smem>>) -> (i32, i32) {
    %c0_i32 = arith.constant 0 : i32
    %c0_i32_0 = arith.constant 0 : i32
    %c0_i32_1 = arith.constant 0 : i32
    return %c0_i32, %c0_i32_0 : i32, i32
  }
  func.func @transform_2(%arg0: i32, %arg1: memref<1xi32, #tpu.memory_space<smem>>) -> (i32, i32) {
    %c0_i32 = arith.constant 0 : i32
    %c0_i32_0 = arith.constant 0 : i32
    %c0_i32_1 = arith.constant 0 : i32
    return %c0_i32, %c0_i32_0 : i32, i32
  }
  func.func @transform_3(%arg0: i32, %arg1: memref<1xi32, #tpu.memory_space<smem>>) -> (i32, i32) {
    %c0_i32 = arith.constant 0 : i32
    %c0_i32_0 = arith.constant 0 : i32
    %c0_i32_1 = arith.constant 0 : i32
    return %c0_i32, %c0_i32_0 : i32, i32
  }
  func.func @transform_4(%arg0: i32, %arg1: memref<1xi32, #tpu.memory_space<smem>>) -> (i32, i32) {
    %c0_i32 = arith.constant 0 : i32
    %c0_i32_0 = arith.constant 0 : i32
    %c0_i32_1 = arith.constant 0 : i32
    return %c0_i32, %c0_i32_0 : i32, i32
  }
  func.func @transform_5(%arg0: i32, %arg1: memref<1xi32, #tpu.memory_space<smem>>) -> (i32, i32) {
    %c0_i32 = arith.constant 0 : i32
    %c0_i32_0 = arith.constant 0 : i32
    %c0_i32_1 = arith.constant 0 : i32
    return %c0_i32, %c0_i32_0 : i32, i32
  }
  func.func @transform_6(%arg0: i32, %arg1: memref<1xi32, #tpu.memory_space<smem>>) -> (i32, i32) {
    %c0_i32 = arith.constant 0 : i32
    %c0_i32_0 = arith.constant 0 : i32
    %c0_i32_1 = arith.constant 0 : i32
    return %c0_i32, %c0_i32_0 : i32, i32
  }
  func.func @transform_7(%arg0: i32, %arg1: memref<1xi32, #tpu.memory_space<smem>>) -> (i32, i32) {
    %c0_i32 = arith.constant 0 : i32
    %c0_i32_0 = arith.constant 0 : i32
    %c0_i32_1 = arith.constant 0 : i32
    return %c0_i32, %c0_i32_0 : i32, i32
  }
  func.func @transform_8(%arg0: i32, %arg1: memref<1xi32, #tpu.memory_space<smem>>) -> (i32, i32) {
    %c0_i32 = arith.constant 0 : i32
    %c0_i32_0 = arith.constant 0 : i32
    %c0_i32_1 = arith.constant 0 : i32
    return %c0_i32, %c0_i32_0 : i32, i32
  }
  func.func @transform_9(%arg0: i32, %arg1: memref<1xi32, #tpu.memory_space<smem>>) -> (i32, i32) {
    %c0_i32 = arith.constant 0 : i32
    %c0_i32_0 = arith.constant 0 : i32
    return %c0_i32, %arg0 : i32, i32
  }
}

</mosaic_0001>

<llo_original>
// kernel: tpu_custom_call.1
$region0: #{tpu_custom_call.1}
  #allocation0 [shape = 'u32[]', space=smem, size = 0x4, offset = 0x4, fixed_abs, tag = 'smem constant byte address 0x4 - core index']
  #allocation1 [shape = 'u32[144,128]{1,0:T(1,128)}', space=vmem, size = 0x12000, scoped, tag = 'internal scratch']
  #allocation2 [shape = 's32[1]{0}', space=sflag, size = 0x4, scoped, tag = 'scoped memory for tpu_custom_call.1']
  #allocation3 [shape = 's32[1]{0:T(128)S(6)}', space=smem, size = 0x200, scoped, tag = 'prefetched SMEM operand 0']
  %s0 = inlined_call_operand.<no memory space> [shape: s32[1], index: 0, kind: input, shape index: {}]
  %s1 = inlined_call_operand.vmem [shape: f32[16,128], index: 1, kind: input, shape index: {}]
  %s2 = inlined_call_operand.vmem [shape: f32[50,16], index: 2, kind: input, shape index: {}]
  %s3 = inlined_call_operand.vmem [shape: f32[50,1], index: 3, kind: input, shape index: {}]
  %s4 = inlined_call_operand.vmem [shape: f32[50,50], index: 4, kind: input, shape index: {}]
  %s5 = inlined_call_operand.vmem [shape: f32[50,1], index: 5, kind: input, shape index: {}]
  %s6 = inlined_call_operand.vmem [shape: f32[20,50], index: 6, kind: input, shape index: {}]
  %s7 = inlined_call_operand.vmem [shape: f32[20,1], index: 7, kind: input, shape index: {}]
  %s8 = inlined_call_operand.vmem [shape: f32[2,20], index: 8, kind: input, shape index: {}]
  %s9 = inlined_call_operand.vmem [shape: f32[2,1], index: 9, kind: input, shape index: {}]
  %s10 = inlined_call_operand.hbm [shape: f32[2,128], index: 10, kind: output, shape index: {}]
  %s11 = sld [smem:[#allocation0]]
  $region46: #{tpu_custom_call.1} parent=0
    _
  %s13 = ssub.s32 1, %s11
  %s14 = scalar_select 0, %s13, %s11
  %15 = sst [smem:[#allocation3]] %s0
  $region1: #{tpu_custom_call.1} parent=0
    #allocation4 [shape = 'u8[1024]{0}', space=vmem, size = 0x400, scoped, tag = 'output window, operand 0, single buffered']
    #allocation5 [shape = 's32[1]{0}', space=sflag, size = 0x4, scoped, tag = 'scoped memory for tpu_custom_call.1']
    %16 = vsyncpa [#allocation5], 0
    // Predicated region
    $region2: #{tpu_custom_call.1} parent=1 // pred_check
      _
    $region3: #{tpu_custom_call.1} parent=1 // pred_check_branch
      %18 = sbr.rel (0) target = $region5
    $region4: #{tpu_custom_call.1} parent=1 // pred_region
      _
    $region5: #{tpu_custom_call.1} parent=1 // pred_fallthru
      _
    // Predicated region
    $region6: #{tpu_custom_call.1} parent=1 // pred_check
      _
    $region7: #{tpu_custom_call.1} parent=1 // pred_check_branch
      %20 = sbr.rel (0) target = $region9
    $region8: #{tpu_custom_call.1} parent=1 // pred_region
      _
    $region9: #{tpu_custom_call.1} parent=1 // pred_fallthru
      _
    // Predicated region
    $region10: #{tpu_custom_call.1} parent=1 // pred_check
      _
    $region11: #{tpu_custom_call.1} parent=1 // pred_check_branch
      %22 = sbr.rel (0) target = $region13
    $region12: #{tpu_custom_call.1} parent=1 // pred_region
      _
    $region13: #{tpu_custom_call.1} parent=1 // pred_fallthru
      _
    // Predicated region
    $region14: #{tpu_custom_call.1} parent=1 // pred_check
      _
    $region15: #{tpu_custom_call.1} parent=1 // pred_check_branch
      %24 = sbr.rel (0) target = $region17
    $region16: #{tpu_custom_call.1} parent=1 // pred_region
      _
    $region17: #{tpu_custom_call.1} parent=1 // pred_fallthru
      _
    // Predicated region
    $region18: #{tpu_custom_call.1} parent=1 // pred_check
      _
    $region19: #{tpu_custom_call.1} parent=1 // pred_check_branch
      %26 = sbr.rel (0) target = $region21
    $region20: #{tpu_custom_call.1} parent=1 // pred_region
      _
    $region21: #{tpu_custom_call.1} parent=1 // pred_fallthru
      _
    // Predicated region
    $region22: #{tpu_custom_call.1} parent=1 // pred_check
      _
    $region23: #{tpu_custom_call.1} parent=1 // pred_check_branch
      %28 = sbr.rel (0) target = $region25
    $region24: #{tpu_custom_call.1} parent=1 // pred_region
      _
    $region25: #{tpu_custom_call.1} parent=1 // pred_fallthru
      _
    // Predicated region
    $region26: #{tpu_custom_call.1} parent=1 // pred_check
      _
    $region27: #{tpu_custom_call.1} parent=1 // pred_check_branch
      %30 = sbr.rel (0) target = $region29
    $region28: #{tpu_custom_call.1} parent=1 // pred_region
      _
    $region29: #{tpu_custom_call.1} parent=1 // pred_fallthru
      _
    // Predicated region
    $region30: #{tpu_custom_call.1} parent=1 // pred_check
      _
    $region31: #{tpu_custom_call.1} parent=1 // pred_check_branch
      %32 = sbr.rel (0) target = $region33
    $region32: #{tpu_custom_call.1} parent=1 // pred_region
      _
    $region33: #{tpu_custom_call.1} parent=1 // pred_fallthru
      _
    // Predicated region
    $region34: #{tpu_custom_call.1} parent=1 // pred_check
      _
    $region35: #{tpu_custom_call.1} parent=1 // pred_check_branch
      %34 = sbr.rel (0) target = $region37
    $region36: #{tpu_custom_call.1} parent=1 // pred_region
      _
    $region37: #{tpu_custom_call.1} parent=1 // pred_fallthru
      _
    %s35 = sld [smem:[#allocation3]]
    %s36 = smul.u32 0, 128
    %v37 = vld [vmem:[%s1] sm:$0xff]
    %v38 = vld [vmem:[%s1 + $0x8] sm:$0xff]
    %v39 = vld [vmem:[%s2] sm:$0xff]
    %v40 = vld [vmem:[%s2 + $0x8] sm:$0xff]
    %v41 = vld [vmem:[%s2 + $0x10] sm:$0xff]
    %v42 = vld [vmem:[%s2 + $0x18] sm:$0xff]
    %v43 = vld [vmem:[%s2 + $0x20] sm:$0xff]
    %v44 = vld [vmem:[%s2 + $0x28] sm:$0xff]
    %v45 = vld [vmem:[%s2 + $0x30] sm:$0x3]
    %v46 = vld [vmem:[%s3] sm:$0xff]
    %v47 = vld [vmem:[%s3 + $0x8] sm:$0xff]
    %v48 = vld [vmem:[%s3 + $0x10] sm:$0xff]
    %v49 = vld [vmem:[%s3 + $0x18] sm:$0xff]
    %v50 = vld [vmem:[%s3 + $0x20] sm:$0xff]
    %v51 = vld [vmem:[%s3 + $0x28] sm:$0xff]
    %v52 = vld [vmem:[%s3 + $0x30] sm:$0x3]
    %54 = vset.pattern.permute.xlu0 0
    %55 = vperm.xlu0 %54, %v46
    %v56 = vpop.permute.xlu0 %55
    %59 = vset.pattern.permute.xlu0 0
    %60 = vperm.xlu0 %59, %v47
    %v61 = vpop.permute.xlu0 %60
    %64 = vset.pattern.permute.xlu0 0
    %65 = vperm.xlu0 %64, %v48
    %v66 = vpop.permute.xlu0 %65
    %69 = vset.pattern.permute.xlu0 0
    %70 = vperm.xlu0 %69, %v49
    %v71 = vpop.permute.xlu0 %70
    %74 = vset.pattern.permute.xlu0 0
    %75 = vperm.xlu0 %74, %v50
    %v76 = vpop.permute.xlu0 %75
    %79 = vset.pattern.permute.xlu0 0
    %80 = vperm.xlu0 %79, %v51
    %v81 = vpop.permute.xlu0 %80
    %84 = vset.pattern.permute.xlu0 0
    %85 = vperm.xlu0 %84, %v52
    %v86 = vpop.permute.xlu0 %85
    %vm88 = vcmask 130048
    %v90 = vsel %vm88, %v39, 0
    %v93 = vsel %vm88, %v40, 0
    %v96 = vsel %vm88, %v41, 0
    %v99 = vsel %vm88, %v42, 0
    %v102 = vsel %vm88, %v43, 0
    %v105 = vsel %vm88, %v44, 0
    %v108 = vsel %vm88, %v45, 0
    %110 = vmatprep.subr.mxu0 0.0
    %111 = vmatpush1.msra.mxu0 %v37
    %112 = vmatprep.subr.mxu0 0.0
    %113 = vmatpush1.msra.mxu0 %v38
    %114 = vmatprep.subr.mxu0 0.0
    %115 = vmatpush1.msra.mxu0 0.0
    %116 = vmatprep.subr.mxu0 0.0
    %117 = vmatpush1.msra.mxu0 0.0
    %118 = vmatprep.subr.mxu0 0.0
    %119 = vmatpush1.msra.mxu0 0.0
    %120 = vmatprep.subr.mxu0 0.0
    %121 = vmatpush1.msra.mxu0 0.0
    %122 = vmatprep.subr.mxu0 0.0
    %123 = vmatpush1.msra.mxu0 0.0
    %124 = vmatprep.subr.mxu0 0.0
    %125 = vmatpush1.msra.mxu0 0.0
    %126 = vmatprep.subr.mxu0 0.0
    %127 = vmatpush1.msra.mxu0 0.0
    %128 = vmatprep.subr.mxu0 0.0
    %129 = vmatpush1.msra.mxu0 0.0
    %130 = vmatprep.subr.mxu0 0.0
    %131 = vmatpush1.msra.mxu0 0.0
    %132 = vmatprep.subr.mxu0 0.0
    %133 = vmatpush1.msra.mxu0 0.0
    %134 = vmatprep.subr.mxu0 0.0
    %135 = vmatpush1.msra.mxu0 0.0
    %136 = vmatprep.subr.mxu0 0.0
    %137 = vmatpush1.msra.mxu0 0.0
    %138 = vmatprep.subr.mxu0 0.0
    %139 = vmatpush1.msra.mxu0 0.0
    %140 = vmatprep.subr.mxu0 0.0
    %141 = vmatpush1.msra.mxu0 0.0
    %142 = vmatprep.subr.mxu0 0.0
    %143 = vmatpush1.msra.mxu0 0.0
    %144 = vmatprep.subr.mxu0 0.0
    %145 = vmatpush1.msra.mxu0 0.0
    %146 = vmatprep.subr.mxu0 0.0
    %147 = vmatpush1.msra.mxu0 0.0
    %148 = vmatprep.subr.mxu0 0.0
    %149 = vmatpush1.msra.mxu0 0.0
    %150 = vmatprep.subr.mxu0 0.0
    %151 = vmatpush1.msra.mxu0 0.0
    %152 = vmatprep.subr.mxu0 0.0
    %153 = vmatpush1.msra.mxu0 0.0
    %154 = vmatprep.subr.mxu0 0.0
    %155 = vmatpush1.msra.mxu0 0.0
    %156 = vmatprep.subr.mxu0 0.0
    %157 = vmatpush1.msra.mxu0 0.0
    %158 = vmatprep.subr.mxu0 0.0
    %159 = vmatpush1.msra.mxu0 0.0
    %160 = vmatprep.subr.mxu0 0.0
    %161 = vmatpush1.msra.mxu0 0.0
    %162 = vmatprep.subr.mxu0 0.0
    %163 = vmatpush1.msra.mxu0 0.0
    %164 = vmatprep.subr.mxu0 0.0
    %165 = vmatpush1.msra.mxu0 0.0
    %166 = vmatprep.subr.mxu0 0.0
    %167 = vmatpush1.msra.mxu0 0.0
    %168 = vmatprep.subr.mxu0 0.0
    %169 = vmatpush1.msra.mxu0 0.0
    %170 = vmatprep.subr.mxu0 0.0
    %171 = vmatpush1.msra.mxu0 0.0
    %172 = vmatprep.subr.mxu0 0.0
    %173 = vmatpush1.msra.mxu0 0.0
    %174 = vmatprep.mubr.f32.mxu0 0.0
    %175 = vmatmul.mubr.f32.gmra.mrb[0].mxu0 %v90
    %v176 = vpop.f32.mrb[0].mxu0
    %v177 = vadd.f32 %v56, %v176
    %v178 = vpop.f32.mrb[0].mxu0
    %179 = vmatprep.mubr.f32.mxu0 0.0
    %180 = vmatmul.mubr.f32.gmra.mrb[0].mxu0 %v93
    %v181 = vpop.f32.mrb[0].mxu0
    %v182 = vadd.f32 %v61, %v181
    %v183 = vpop.f32.mrb[0].mxu0
    %184 = vmatprep.mubr.f32.mxu0 0.0
    %185 = vmatmul.mubr.f32.gmra.mrb[0].mxu0 %v96
    %v186 = vpop.f32.mrb[0].mxu0
    %v187 = vadd.f32 %v66, %v186
    %v188 = vpop.f32.mrb[0].mxu0
    %189 = vmatprep.mubr.f32.mxu0 0.0
    %190 = vmatmul.mubr.f32.gmra.mrb[0].mxu0 %v99
    %v191 = vpop.f32.mrb[0].mxu0
    %v192 = vadd.f32 %v71, %v191
    %v193 = vpop.f32.mrb[0].mxu0
    %194 = vmatprep.mubr.f32.mxu0 0.0
    %195 = vmatmul.mubr.f32.gmra.mrb[0].mxu0 %v102
    %v196 = vpop.f32.mrb[0].mxu0
    %v197 = vadd.f32 %v76, %v196
    %v198 = vpop.f32.mrb[0].mxu0
    %199 = vmatprep.mubr.f32.mxu0 0.0
    %200 = vmatmul.mubr.f32.gmra.mrb[0].mxu0 %v105
    %v201 = vpop.f32.mrb[0].mxu0
    %v202 = vadd.f32 %v81, %v201
    %v203 = vpop.f32.mrb[0].mxu0
    %204 = vmatprep.mubr.f32.mxu0 0.0
    %205 = vmatmul.mubr.f32.gmra.mrb[0].mxu0 %v108
    %v206 = vpop.f32.mrb[0].mxu0
    %v207 = vadd.f32 %v86, %v206
    %v208 = vpop.f32.mrb[0].mxu0
    %209 = vdwg.mxu0
    %vm210 = vcmp.gt.f32.partialorder %v177, 20.0
    %vm211 = vcmp.gt.f32.partialorder %v182, 20.0
    %vm212 = vcmp.gt.f32.partialorder %v187, 20.0
    %vm213 = vcmp.gt.f32.partialorder %v192, 20.0
    %vm214 = vcmp.gt.f32.partialorder %v197, 20.0
    %vm215 = vcmp.gt.f32.partialorder %v202, 20.0
    %vm216 = vcmp.gt.f32.partialorder %v207, 20.0
    %v217 = vmin.f32 %v177, 20.0
    %v218 = vmin.f32 %v182, 20.0
    %v219 = vmin.f32 %v187, 20.0
    %v220 = vmin.f32 %v192, 20.0
    %v221 = vmin.f32 %v197, 20.0
    %v222 = vmin.f32 %v202, 20.0
    %v223 = vmin.f32 %v207, 20.0
    %v224 = vmul.f32 %v217, 1.442695
    %v225 = vpow.pop %v224
    %v226 = vmul.f32 %v218, 1.442695
    %v227 = vpow.pop %v226
    %v228 = vmul.f32 %v219, 1.442695
    %v229 = vpow.pop %v228
    %v230 = vmul.f32 %v220, 1.442695
    %v231 = vpow.pop %v230
    %v232 = vmul.f32 %v221, 1.442695
    %v233 = vpow.pop %v232
    %v234 = vmul.f32 %v222, 1.442695
    %v235 = vpow.pop %v234
    %v236 = vmul.f32 %v223, 1.442695
    %v237 = vpow.pop %v236
    %v238 = vadd.f32 %v225, 1.0
    %v239 = vadd.f32 %v227, 1.0
    %v240 = vadd.f32 %v229, 1.0
    %v241 = vadd.f32 %v231, 1.0
    %v242 = vadd.f32 %v233, 1.0
    %v243 = vadd.f32 %v235, 1.0
    %v244 = vadd.f32 %v237, 1.0
    %v245 = vlog2.pop %v238
    %v246 = vmul.f32 %v245, 0.6931472
    %v247 = vlog2.pop %v239
    %v248 = vmul.f32 %v247, 0.6931472
    %v249 = vlog2.pop %v240
    %v250 = vmul.f32 %v249, 0.6931472
    %v251 = vlog2.pop %v241
    %v252 = vmul.f32 %v251, 0.6931472
    %v253 = vlog2.pop %v242
    %v254 = vmul.f32 %v253, 0.6931472
    %v255 = vlog2.pop %v243
    %v256 = vmul.f32 %v255, 0.6931472
    %v257 = vlog2.pop %v244
    %v258 = vmul.f32 %v257, 0.6931472
    %v259 = vsel %vm210, %v177, %v246
    %v260 = vsel %vm211, %v182, %v248
    %v261 = vsel %vm212, %v187, %v250
    %v262 = vsel %vm213, %v192, %v252
    %v263 = vsel %vm214, %v197, %v254
    %v264 = vsel %vm215, %v202, %v256
    %v265 = vsel %vm216, %v207, %v258
    %v266 = vlaneseq
    %v267 = vshrl.u32 %v266, 7
    %v268 = vadd.s32 %v267, 8
    %v269 = vadd.s32 %v267, 16
    %v270 = vadd.s32 %v267, 24
    %v271 = vadd.s32 %v267, 32
    %v272 = vadd.s32 %v267, 40
    %v273 = vadd.s32 %v267, 48
    %v274 = vlaneseq
    %v275 = vand.u32 %v274, 127
    %v276 = vstv %s36
    %v277 = vadd.s32 %v275, %v276
    %v278 = vadd.s32 %v277, 16777619
    %v279 = vstv %s35
    %v280 = vxor.u32 %v278, %v279
    %v281 = vshra.s32 %v280, 16
    %v282 = vxor.u32 %v280, %v281
    %v283 = vmul.u32 %v282, 2146121005
    %v284 = vshra.s32 %v283, 15
    %v285 = vxor.u32 %v283, %v284
    %v286 = vmul.u32 %v285, 843314857
    %v287 = vshra.s32 %v286, 16
    %v288 = vxor.u32 %v286, %v287
    %v289 = vmul.u32 %v267, 668265263
    %v290 = vmul.u32 %v268, 668265263
    %v291 = vmul.u32 %v269, 668265263
    %v292 = vmul.u32 %v270, 668265263
    %v293 = vmul.u32 %v271, 668265263
    %v294 = vmul.u32 %v272, 668265263
    %v295 = vmul.u32 %v273, 668265263
    %v296 = vadd.s32 %v288, %v289
    %v297 = vadd.s32 %v288, %v290
    %v298 = vadd.s32 %v288, %v291
    %v299 = vadd.s32 %v288, %v292
    %v300 = vadd.s32 %v288, %v293
    %v301 = vadd.s32 %v288, %v294
    %v302 = vadd.s32 %v288, %v295
    %v303 = vshra.s32 %v296, 16
    %v304 = vshra.s32 %v297, 16
    %v305 = vshra.s32 %v298, 16
    %v306 = vshra.s32 %v299, 16
    %v307 = vshra.s32 %v300, 16
    %v308 = vshra.s32 %v301, 16
    %v309 = vshra.s32 %v302, 16
    %v310 = vxor.u32 %v296, %v303
    %v311 = vxor.u32 %v297, %v304
    %v312 = vxor.u32 %v298, %v305
    %v313 = vxor.u32 %v299, %v306
    %v314 = vxor.u32 %v300, %v307
    %v315 = vxor.u32 %v301, %v308
    %v316 = vxor.u32 %v302, %v309
    %v317 = vmul.u32 %v310, 2146121005
    %v318 = vmul.u32 %v311, 2146121005
    %v319 = vmul.u32 %v312, 2146121005
    %v320 = vmul.u32 %v313, 2146121005
    %v321 = vmul.u32 %v314, 2146121005
    %v322 = vmul.u32 %v315, 2146121005
    %v323 = vmul.u32 %v316, 2146121005
    %v324 = vshra.s32 %v317, 15
    %v325 = vshra.s32 %v318, 15
    %v326 = vshra.s32 %v319, 15
    %v327 = vshra.s32 %v320, 15
    %v328 = vshra.s32 %v321, 15
    %v329 = vshra.s32 %v322, 15
    %v330 = vshra.s32 %v323, 15
    %v331 = vxor.u32 %v317, %v324
    %v332 = vxor.u32 %v318, %v325
    %v333 = vxor.u32 %v319, %v326
    %v334 = vxor.u32 %v320, %v327
    %v335 = vxor.u32 %v321, %v328
    %v336 = vxor.u32 %v322, %v329
    %v337 = vxor.u32 %v323, %v330
    %v338 = vmul.u32 %v331, 843314857
    %v339 = vmul.u32 %v332, 843314857
    %v340 = vmul.u32 %v333, 843314857
    %v341 = vmul.u32 %v334, 843314857
    %v342 = vmul.u32 %v335, 843314857
    %v343 = vmul.u32 %v336, 843314857
    %v344 = vmul.u32 %v337, 843314857
    %v345 = vshra.s32 %v338, 16
    %v346 = vshra.s32 %v339, 16
    %v347 = vshra.s32 %v340, 16
    %v348 = vshra.s32 %v341, 16
    %v349 = vshra.s32 %v342, 16
    %v350 = vshra.s32 %v343, 16
    %v351 = vshra.s32 %v344, 16
    %v352 = vxor.u32 %v338, %v345
    %v353 = vxor.u32 %v339, %v346
    %v354 = vxor.u32 %v340, %v347
    %v355 = vxor.u32 %v341, %v348
    %v356 = vxor.u32 %v342, %v349
    %v357 = vxor.u32 %v343, %v350
    %v358 = vxor.u32 %v344, %v351
    %v359 = vand.u32 %v352, 16777215
    %v360 = vand.u32 %v353, 16777215
    %v361 = vand.u32 %v354, 16777215
    %v362 = vand.u32 %v355, 16777215
    %v363 = vand.u32 %v356, 16777215
    %v364 = vand.u32 %v357, 16777215
    %v365 = vand.u32 %v358, 16777215
    %vm366 = vcmp.ge.s32.totalorder %v359, 83886
    %vm367 = vcmp.ge.s32.totalorder %v360, 83886
    %vm368 = vcmp.ge.s32.totalorder %v361, 83886
    %vm369 = vcmp.ge.s32.totalorder %v362, 83886
    %vm370 = vcmp.ge.s32.totalorder %v363, 83886
    %vm371 = vcmp.ge.s32.totalorder %v364, 83886
    %vm372 = vcmp.ge.s32.totalorder %v365, 83886
    %v373 = vmul.f32 %v259, 1.0050251
    %v374 = vmul.f32 %v260, 1.0050251
    %v375 = vmul.f32 %v261, 1.0050251
    %v376 = vmul.f32 %v262, 1.0050251
    %v377 = vmul.f32 %v263, 1.0050251
    %v378 = vmul.f32 %v264, 1.0050251
    %v379 = vmul.f32 %v265, 1.0050251
    %v380 = vsel %vm366, %v373, 0.0
    %v381 = vsel %vm367, %v374, 0.0
    %v382 = vsel %vm368, %v375, 0.0
    %v383 = vsel %vm369, %v376, 0.0
    %v384 = vsel %vm370, %v377, 0.0
    %v385 = vsel %vm371, %v378, 0.0
    %v386 = vsel %vm372, %v379, 0.0
    %v387 = vld [vmem:[%s4] sm:$0xff]
    %v388 = vld [vmem:[%s4 + $0x8] sm:$0xff]
    %v389 = vld [vmem:[%s4 + $0x10] sm:$0xff]
    %v390 = vld [vmem:[%s4 + $0x18] sm:$0xff]
    %v391 = vld [vmem:[%s4 + $0x20] sm:$0xff]
    %v392 = vld [vmem:[%s4 + $0x28] sm:$0xff]
    %v393 = vld [vmem:[%s4 + $0x30] sm:$0x3]
    %v394 = vld [vmem:[%s5] sm:$0xff]
    %v395 = vld [vmem:[%s5 + $0x8] sm:$0xff]
    %v396 = vld [vmem:[%s5 + $0x10] sm:$0xff]
    %v397 = vld [vmem:[%s5 + $0x18] sm:$0xff]
    %v398 = vld [vmem:[%s5 + $0x20] sm:$0xff]
    %v399 = vld [vmem:[%s5 + $0x28] sm:$0xff]
    %v400 = vld [vmem:[%s5 + $0x30] sm:$0x3]
    %402 = vset.pattern.permute.xlu0 0
    %403 = vperm.xlu0 %402, %v394
    %v404 = vpop.permute.xlu0 %403
    %407 = vset.pattern.permute.xlu0 0
    %408 = vperm.xlu0 %407, %v395
    %v409 = vpop.permute.xlu0 %408
    %412 = vset.pattern.permute.xlu0 0
    %413 = vperm.xlu0 %412, %v396
    %v414 = vpop.permute.xlu0 %413
    %417 = vset.pattern.permute.xlu0 0
    %418 = vperm.xlu0 %417, %v397
    %v419 = vpop.permute.xlu0 %418
    %422 = vset.pattern.permute.xlu0 0
    %423 = vperm.xlu0 %422, %v398
    %v424 = vpop.permute.xlu0 %423
    %427 = vset.pattern.permute.xlu0 0
    %428 = vperm.xlu0 %427, %v399
    %v429 = vpop.permute.xlu0 %428
    %432 = vset.pattern.permute.xlu0 0
    %433 = vperm.xlu0 %432, %v400
    %v434 = vpop.permute.xlu0 %433
    %vm436 = vcmask 408576
    %v438 = vsel %vm436, %v387, 0
    %v441 = vsel %vm436, %v388, 0
    %v444 = vsel %vm436, %v389, 0
    %v447 = vsel %vm436, %v390, 0
    %v450 = vsel %vm436, %v391, 0
    %v453 = vsel %vm436, %v392, 0
    %v456 = vsel %vm436, %v393, 0
    %vm458 = vcmask 1041408
    %v460 = vsel %vm458, %v386, 0
    %462 = vmatprep.subr.mxu0 0.0
    %463 = vmatpush1.msra.mxu0 %v380
    %464 = vmatprep.subr.mxu0 0.0
    %465 = vmatpush1.msra.mxu0 %v381
    %466 = vmatprep.subr.mxu0 0.0
    %467 = vmatpush1.msra.mxu0 %v382
    %468 = vmatprep.subr.mxu0 0.0
    %469 = vmatpush1.msra.mxu0 %v383
    %470 = vmatprep.subr.mxu0 0.0
    %471 = vmatpush1.msra.mxu0 %v384
    %472 = vmatprep.subr.mxu0 0.0
    %473 = vmatpush1.msra.mxu0 %v385
    %474 = vmatprep.subr.mxu0 0.0
    %475 = vmatpush1.msra.mxu0 %v460
    %476 = vmatprep.subr.mxu0 0.0
    %477 = vmatpush1.msra.mxu0 0.0
    %478 = vmatprep.subr.mxu0 0.0
    %479 = vmatpush1.msra.mxu0 0.0
    %480 = vmatprep.subr.mxu0 0.0
    %481 = vmatpush1.msra.mxu0 0.0
    %482 = vmatprep.subr.mxu0 0.0
    %483 = vmatpush1.msra.mxu0 0.0
    %484 = vmatprep.subr.mxu0 0.0
    %485 = vmatpush1.msra.mxu0 0.0
    %486 = vmatprep.subr.mxu0 0.0
    %487 = vmatpush1.msra.mxu0 0.0
    %488 = vmatprep.subr.mxu0 0.0
    %489 = vmatpush1.msra.mxu0 0.0
    %490 = vmatprep.subr.mxu0 0.0
    %491 = vmatpush1.msra.mxu0 0.0
    %492 = vmatprep.subr.mxu0 0.0
    %493 = vmatpush1.msra.mxu0 0.0
    %494 = vmatprep.subr.mxu0 0.0
    %495 = vmatpush1.msra.mxu0 0.0
    %496 = vmatprep.subr.mxu0 0.0
    %497 = vmatpush1.msra.mxu0 0.0
    %498 = vmatprep.subr.mxu0 0.0
    %499 = vmatpush1.msra.mxu0 0.0
    %500 = vmatprep.subr.mxu0 0.0
    %501 = vmatpush1.msra.mxu0 0.0
    %502 = vmatprep.subr.mxu0 0.0
    %503 = vmatpush1.msra.mxu0 0.0
    %504 = vmatprep.subr.mxu0 0.0
    %505 = vmatpush1.msra.mxu0 0.0
    %506 = vmatprep.subr.mxu0 0.0
    %507 = vmatpush1.msra.mxu0 0.0
    %508 = vmatprep.subr.mxu0 0.0
    %509 = vmatpush1.msra.mxu0 0.0
    %510 = vmatprep.subr.mxu0 0.0
    %511 = vmatpush1.msra.mxu0 0.0
    %512 = vmatprep.subr.mxu0 0.0
    %513 = vmatpush1.msra.mxu0 0.0
    %514 = vmatprep.subr.mxu0 0.0
    %515 = vmatpush1.msra.mxu0 0.0
    %516 = vmatprep.subr.mxu0 0.0
    %517 = vmatpush1.msra.mxu0 0.0
    %518 = vmatprep.subr.mxu0 0.0
    %519 = vmatpush1.msra.mxu0 0.0
    %520 = vmatprep.subr.mxu0 0.0
    %521 = vmatpush1.msra.mxu0 0.0
    %522 = vmatprep.subr.mxu0 0.0
    %523 = vmatpush1.msra.mxu0 0.0
    %524 = vmatprep.subr.mxu0 0.0
    %525 = vmatpush1.msra.mxu0 0.0
    %526 = vmatprep.mubr.f32.mxu0 0.0
    %527 = vmatmul.mubr.f32.gmra.mrb[0].mxu0 %v438
    %v528 = vpop.f32.mrb[0].mxu0
    %v529 = vadd.f32 %v404, %v528
    %v530 = vpop.f32.mrb[0].mxu0
    %531 = vmatprep.mubr.f32.mxu0 0.0
    %532 = vmatmul.mubr.f32.gmra.mrb[0].mxu0 %v441
    %v533 = vpop.f32.mrb[0].mxu0
    %v534 = vadd.f32 %v409, %v533
    %v535 = vpop.f32.mrb[0].mxu0
    %536 = vmatprep.mubr.f32.mxu0 0.0
    %537 = vmatmul.mubr.f32.gmra.mrb[0].mxu0 %v444
    %v538 = vpop.f32.mrb[0].mxu0
    %v539 = vadd.f32 %v414, %v538
    %v540 = vpop.f32.mrb[0].mxu0
    %541 = vmatprep.mubr.f32.mxu0 0.0
    %542 = vmatmul.mubr.f32.gmra.mrb[0].mxu0 %v447
    %v543 = vpop.f32.mrb[0].mxu0
    %v544 = vadd.f32 %v419, %v543
    %v545 = vpop.f32.mrb[0].mxu0
    %546 = vmatprep.mubr.f32.mxu0 0.0
    %547 = vmatmul.mubr.f32.gmra.mrb[0].mxu0 %v450
    %v548 = vpop.f32.mrb[0].mxu0
    %v549 = vadd.f32 %v424, %v548
    %v550 = vpop.f32.mrb[0].mxu0
    %551 = vmatprep.mubr.f32.mxu0 0.0
    %552 = vmatmul.mubr.f32.gmra.mrb[0].mxu0 %v453
    %v553 = vpop.f32.mrb[0].mxu0
    %v554 = vadd.f32 %v429, %v553
    %v555 = vpop.f32.mrb[0].mxu0
    %556 = vmatprep.mubr.f32.mxu0 0.0
    %557 = vmatmul.mubr.f32.gmra.mrb[0].mxu0 %v456
    %v558 = vpop.f32.mrb[0].mxu0
    %v559 = vadd.f32 %v434, %v558
    %v560 = vpop.f32.mrb[0].mxu0
    %561 = vdwg.mxu0
    %vm562 = vcmp.gt.f32.partialorder %v529, 20.0
    %vm563 = vcmp.gt.f32.partialorder %v534, 20.0
    %vm564 = vcmp.gt.f32.partialorder %v539, 20.0
    %vm565 = vcmp.gt.f32.partialorder %v544, 20.0
    %vm566 = vcmp.gt.f32.partialorder %v549, 20.0
    %vm567 = vcmp.gt.f32.partialorder %v554, 20.0
    %vm568 = vcmp.gt.f32.partialorder %v559, 20.0
    %v569 = vmin.f32 %v529, 20.0
    %v570 = vmin.f32 %v534, 20.0
    %v571 = vmin.f32 %v539, 20.0
    %v572 = vmin.f32 %v544, 20.0
    %v573 = vmin.f32 %v549, 20.0
    %v574 = vmin.f32 %v554, 20.0
    %v575 = vmin.f32 %v559, 20.0
    %v576 = vmul.f32 %v569, 1.442695
    %v577 = vpow.pop %v576
    %v578 = vmul.f32 %v570, 1.442695
    %v579 = vpow.pop %v578
    %v580 = vmul.f32 %v571, 1.442695
    %v581 = vpow.pop %v580
    %v582 = vmul.f32 %v572, 1.442695
    %v583 = vpow.pop %v582
    %v584 = vmul.f32 %v573, 1.442695
    %v585 = vpow.pop %v584
    %v586 = vmul.f32 %v574, 1.442695
    %v587 = vpow.pop %v586
    %v588 = vmul.f32 %v575, 1.442695
    %v589 = vpow.pop %v588
    %v590 = vadd.f32 %v577, 1.0
    %v591 = vadd.f32 %v579, 1.0
    %v592 = vadd.f32 %v581, 1.0
    %v593 = vadd.f32 %v583, 1.0
    %v594 = vadd.f32 %v585, 1.0
    %v595 = vadd.f32 %v587, 1.0
    %v596 = vadd.f32 %v589, 1.0
    %v597 = vlog2.pop %v590
    %v598 = vmul.f32 %v597, 0.6931472
    %v599 = vlog2.pop %v591
    %v600 = vmul.f32 %v599, 0.6931472
    %v601 = vlog2.pop %v592
    %v602 = vmul.f32 %v601, 0.6931472
    %v603 = vlog2.pop %v593
    %v604 = vmul.f32 %v603, 0.6931472
    %v605 = vlog2.pop %v594
    %v606 = vmul.f32 %v605, 0.6931472
    %v607 = vlog2.pop %v595
    %v608 = vmul.f32 %v607, 0.6931472
    %v609 = vlog2.pop %v596
    %v610 = vmul.f32 %v609, 0.6931472
    %v611 = vsel %vm562, %v529, %v598
    %v612 = vsel %vm563, %v534, %v600
    %v613 = vsel %vm564, %v539, %v602
    %v614 = vsel %vm565, %v544, %v604
    %v615 = vsel %vm566, %v549, %v606
    %v616 = vsel %vm567, %v554, %v608
    %v617 = vsel %vm568, %v559, %v610
    %v618 = vadd.s32 %v277, 33555238
    %v619 = vxor.u32 %v618, %v279
    %v620 = vshra.s32 %v619, 16
    %v621 = vxor.u32 %v619, %v620
    %v622 = vmul.u32 %v621, 2146121005
    %v623 = vshra.s32 %v622, 15
    %v624 = vxor.u32 %v622, %v623
    %v625 = vmul.u32 %v624, 843314857
    %v626 = vshra.s32 %v625, 16
    %v627 = vxor.u32 %v625, %v626
    %v628 = vadd.s32 %v627, %v289
    %v629 = vadd.s32 %v627, %v290
    %v630 = vadd.s32 %v627, %v291
    %v631 = vadd.s32 %v627, %v292
    %v632 = vadd.s32 %v627, %v293
    %v633 = vadd.s32 %v627, %v294
    %v634 = vadd.s32 %v627, %v295
    %v635 = vshra.s32 %v628, 16
    %v636 = vshra.s32 %v629, 16
    %v637 = vshra.s32 %v630, 16
    %v638 = vshra.s32 %v631, 16
    %v639 = vshra.s32 %v632, 16
    %v640 = vshra.s32 %v633, 16
    %v641 = vshra.s32 %v634, 16
    %v642 = vxor.u32 %v628, %v635
    %v643 = vxor.u32 %v629, %v636
    %v644 = vxor.u32 %v630, %v637
    %v645 = vxor.u32 %v631, %v638
    %v646 = vxor.u32 %v632, %v639
    %v647 = vxor.u32 %v633, %v640
    %v648 = vxor.u32 %v634, %v641
    %v649 = vmul.u32 %v642, 2146121005
    %v650 = vmul.u32 %v643, 2146121005
    %v651 = vmul.u32 %v644, 2146121005
    %v652 = vmul.u32 %v645, 2146121005
    %v653 = vmul.u32 %v646, 2146121005
    %v654 = vmul.u32 %v647, 2146121005
    %v655 = vmul.u32 %v648, 2146121005
    %v656 = vshra.s32 %v649, 15
    %v657 = vshra.s32 %v650, 15
    %v658 = vshra.s32 %v651, 15
    %v659 = vshra.s32 %v652, 15
    %v660 = vshra.s32 %v653, 15
    %v661 = vshra.s32 %v654, 15
    %v662 = vshra.s32 %v655, 15
    %v663 = vxor.u32 %v649, %v656
    %v664 = vxor.u32 %v650, %v657
    %v665 = vxor.u32 %v651, %v658
    %v666 = vxor.u32 %v652, %v659
    %v667 = vxor.u32 %v653, %v660
    %v668 = vxor.u32 %v654, %v661
    %v669 = vxor.u32 %v655, %v662
    %v670 = vmul.u32 %v663, 843314857
    %v671 = vmul.u32 %v664, 843314857
    %v672 = vmul.u32 %v665, 843314857
    %v673 = vmul.u32 %v666, 843314857
    %v674 = vmul.u32 %v667, 843314857
    %v675 = vmul.u32 %v668, 843314857
    %v676 = vmul.u32 %v669, 843314857
    %v677 = vshra.s32 %v670, 16
    %v678 = vshra.s32 %v671, 16
    %v679 = vshra.s32 %v672, 16
    %v680 = vshra.s32 %v673, 16
    %v681 = vshra.s32 %v674, 16
    %v682 = vshra.s32 %v675, 16
    %v683 = vshra.s32 %v676, 16
    %v684 = vxor.u32 %v670, %v677
    %v685 = vxor.u32 %v671, %v678
    %v686 = vxor.u32 %v672, %v679
    %v687 = vxor.u32 %v673, %v680
    %v688 = vxor.u32 %v674, %v681
    %v689 = vxor.u32 %v675, %v682
    %v690 = vxor.u32 %v676, %v683
    %v691 = vand.u32 %v684, 16777215
    %v692 = vand.u32 %v685, 16777215
    %v693 = vand.u32 %v686, 16777215
    %v694 = vand.u32 %v687, 16777215
    %v695 = vand.u32 %v688, 16777215
    %v696 = vand.u32 %v689, 16777215
    %v697 = vand.u32 %v690, 16777215
    %vm698 = vcmp.ge.s32.totalorder %v691, 83886
    %vm699 = vcmp.ge.s32.totalorder %v692, 83886
    %vm700 = vcmp.ge.s32.totalorder %v693, 83886
    %vm701 = vcmp.ge.s32.totalorder %v694, 83886
    %vm702 = vcmp.ge.s32.totalorder %v695, 83886
    %vm703 = vcmp.ge.s32.totalorder %v696, 83886
    %vm704 = vcmp.ge.s32.totalorder %v697, 83886
    %v705 = vmul.f32 %v611, 1.0050251
    %v706 = vmul.f32 %v612, 1.0050251
    %v707 = vmul.f32 %v613, 1.0050251
    %v708 = vmul.f32 %v614, 1.0050251
    %v709 = vmul.f32 %v615, 1.0050251
    %v710 = vmul.f32 %v616, 1.0050251
    %v711 = vmul.f32 %v617, 1.0050251
    %v712 = vsel %vm698, %v705, 0.0
    %v713 = vsel %vm699, %v706, 0.0
    %v714 = vsel %vm700, %v707, 0.0
    %v715 = vsel %vm701, %v708, 0.0
    %v716 = vsel %vm702, %v709, 0.0
    %v717 = vsel %vm703, %v710, 0.0
    %v718 = vsel %vm704, %v711, 0.0
    %v719 = vld [vmem:[%s6] sm:$0xff]
    %v720 = vld [vmem:[%s6 + $0x8] sm:$0xff]
    %v721 = vld [vmem:[%s6 + $0x10] sm:$0xf]
    %v722 = vld [vmem:[%s7] sm:$0xff]
    %v723 = vld [vmem:[%s7 + $0x8] sm:$0xff]
    %v724 = vld [vmem:[%s7 + $0x10] sm:$0xf]
    %726 = vset.pattern.permute.xlu0 0
    %727 = vperm.xlu0 %726, %v722
    %v728 = vpop.permute.xlu0 %727
    %731 = vset.pattern.permute.xlu0 0
    %732 = vperm.xlu0 %731, %v723
    %v733 = vpop.permute.xlu0 %732
    %736 = vset.pattern.permute.xlu0 0
    %737 = vperm.xlu0 %736, %v724
    %v738 = vpop.permute.xlu0 %737
    %v741 = vsel %vm436, %v719, 0
    %v744 = vsel %vm436, %v720, 0
    %v747 = vsel %vm436, %v721, 0
    %v750 = vsel %vm458, %v718, 0
    %752 = vmatprep.subr.mxu0 0.0
    %753 = vmatpush1.msra.mxu0 %v712
    %754 = vmatprep.subr.mxu0 0.0
    %755 = vmatpush1.msra.mxu0 %v713
    %756 = vmatprep.subr.mxu0 0.0
    %757 = vmatpush1.msra.mxu0 %v714
    %758 = vmatprep.subr.mxu0 0.0
    %759 = vmatpush1.msra.mxu0 %v715
    %760 = vmatprep.subr.mxu0 0.0
    %761 = vmatpush1.msra.mxu0 %v716
    %762 = vmatprep.subr.mxu0 0.0
    %763 = vmatpush1.msra.mxu0 %v717
    %764 = vmatprep.subr.mxu0 0.0
    %765 = vmatpush1.msra.mxu0 %v750
    %766 = vmatprep.subr.mxu0 0.0
    %767 = vmatpush1.msra.mxu0 0.0
    %768 = vmatprep.subr.mxu0 0.0
    %769 = vmatpush1.msra.mxu0 0.0
    %770 = vmatprep.subr.mxu0 0.0
    %771 = vmatpush1.msra.mxu0 0.0
    %772 = vmatprep.subr.mxu0 0.0
    %773 = vmatpush1.msra.mxu0 0.0
    %774 = vmatprep.subr.mxu0 0.0
    %775 = vmatpush1.msra.mxu0 0.0
    %776 = vmatprep.subr.mxu0 0.0
    %777 = vmatpush1.msra.mxu0 0.0
    %778 = vmatprep.subr.mxu0 0.0
    %779 = vmatpush1.msra.mxu0 0.0
    %780 = vmatprep.subr.mxu0 0.0
    %781 = vmatpush1.msra.mxu0 0.0
    %782 = vmatprep.subr.mxu0 0.0
    %783 = vmatpush1.msra.mxu0 0.0
    %784 = vmatprep.subr.mxu0 0.0
    %785 = vmatpush1.msra.mxu0 0.0
    %786 = vmatprep.subr.mxu0 0.0
    %787 = vmatpush1.msra.mxu0 0.0
    %788 = vmatprep.subr.mxu0 0.0
    %789 = vmatpush1.msra.mxu0 0.0
    %790 = vmatprep.subr.mxu0 0.0
    %791 = vmatpush1.msra.mxu0 0.0
    %792 = vmatprep.subr.mxu0 0.0
    %793 = vmatpush1.msra.mxu0 0.0
    %794 = vmatprep.subr.mxu0 0.0
    %795 = vmatpush1.msra.mxu0 0.0
    %796 = vmatprep.subr.mxu0 0.0
    %797 = vmatpush1.msra.mxu0 0.0
    %798 = vmatprep.subr.mxu0 0.0
    %799 = vmatpush1.msra.mxu0 0.0
    %800 = vmatprep.subr.mxu0 0.0
    %801 = vmatpush1.msra.mxu0 0.0
    %802 = vmatprep.subr.mxu0 0.0
    %803 = vmatpush1.msra.mxu0 0.0
    %804 = vmatprep.subr.mxu0 0.0
    %805 = vmatpush1.msra.mxu0 0.0
    %806 = vmatprep.subr.mxu0 0.0
    %807 = vmatpush1.msra.mxu0 0.0
    %808 = vmatprep.subr.mxu0 0.0
    %809 = vmatpush1.msra.mxu0 0.0
    %810 = vmatprep.subr.mxu0 0.0
    %811 = vmatpush1.msra.mxu0 0.0
    %812 = vmatprep.subr.mxu0 0.0
    %813 = vmatpush1.msra.mxu0 0.0
    %814 = vmatprep.subr.mxu0 0.0
    %815 = vmatpush1.msra.mxu0 0.0
    %816 = vmatprep.mubr.f32.mxu0 0.0
    %817 = vmatmul.mubr.f32.gmra.mrb[0].mxu0 %v741
    %v818 = vpop.f32.mrb[0].mxu0
    %v819 = vadd.f32 %v728, %v818
    %v820 = vpop.f32.mrb[0].mxu0
    %821 = vmatprep.mubr.f32.mxu0 0.0
    %822 = vmatmul.mubr.f32.gmra.mrb[0].mxu0 %v744
    %v823 = vpop.f32.mrb[0].mxu0
    %v824 = vadd.f32 %v733, %v823
    %v825 = vpop.f32.mrb[0].mxu0
    %826 = vmatprep.mubr.f32.mxu0 0.0
    %827 = vmatmul.mubr.f32.gmra.mrb[0].mxu0 %v747
    %v828 = vpop.f32.mrb[0].mxu0
    %v829 = vadd.f32 %v738, %v828
    %v830 = vpop.f32.mrb[0].mxu0
    %831 = vdwg.mxu0
    %vm832 = vcmp.gt.f32.partialorder %v819, 20.0
    %vm833 = vcmp.gt.f32.partialorder %v824, 20.0
    %vm834 = vcmp.gt.f32.partialorder %v829, 20.0
    %v835 = vmin.f32 %v819, 20.0
    %v836 = vmin.f32 %v824, 20.0
    %v837 = vmin.f32 %v829, 20.0
    %v838 = vmul.f32 %v835, 1.442695
    %v839 = vpow.pop %v838
    %v840 = vmul.f32 %v836, 1.442695
    %v841 = vpow.pop %v840
    %v842 = vmul.f32 %v837, 1.442695
    %v843 = vpow.pop %v842
    %v844 = vadd.f32 %v839, 1.0
    %v845 = vadd.f32 %v841, 1.0
    %v846 = vadd.f32 %v843, 1.0
    %v847 = vlog2.pop %v844
    %v848 = vmul.f32 %v847, 0.6931472
    %v849 = vlog2.pop %v845
    %v850 = vmul.f32 %v849, 0.6931472
    %v851 = vlog2.pop %v846
    %v852 = vmul.f32 %v851, 0.6931472
    %v853 = vsel %vm832, %v819, %v848
    %v854 = vsel %vm833, %v824, %v850
    %v855 = vsel %vm834, %v829, %v852
    %v856 = vadd.s32 %v277, 50332857
    %v857 = vxor.u32 %v856, %v279
    %v858 = vshra.s32 %v857, 16
    %v859 = vxor.u32 %v857, %v858
    %v860 = vmul.u32 %v859, 2146121005
    %v861 = vshra.s32 %v860, 15
    %v862 = vxor.u32 %v860, %v861
    %v863 = vmul.u32 %v862, 843314857
    %v864 = vshra.s32 %v863, 16
    %v865 = vxor.u32 %v863, %v864
    %v866 = vadd.s32 %v865, %v289
    %v867 = vadd.s32 %v865, %v290
    %v868 = vadd.s32 %v865, %v291
    %v869 = vshra.s32 %v866, 16
    %v870 = vshra.s32 %v867, 16
    %v871 = vshra.s32 %v868, 16
    %v872 = vxor.u32 %v866, %v869
    %v873 = vxor.u32 %v867, %v870
    %v874 = vxor.u32 %v868, %v871
    %v875 = vmul.u32 %v872, 2146121005
    %v876 = vmul.u32 %v873, 2146121005
    %v877 = vmul.u32 %v874, 2146121005
    %v878 = vshra.s32 %v875, 15
    %v879 = vshra.s32 %v876, 15
    %v880 = vshra.s32 %v877, 15
    %v881 = vxor.u32 %v875, %v878
    %v882 = vxor.u32 %v876, %v879
    %v883 = vxor.u32 %v877, %v880
    %v884 = vmul.u32 %v881, 843314857
    %v885 = vmul.u32 %v882, 843314857
    %v886 = vmul.u32 %v883, 843314857
    %v887 = vshra.s32 %v884, 16
    %v888 = vshra.s32 %v885, 16
    %v889 = vshra.s32 %v886, 16
    %v890 = vxor.u32 %v884, %v887
    %v891 = vxor.u32 %v885, %v888
    %v892 = vxor.u32 %v886, %v889
    %v893 = vand.u32 %v890, 16777215
    %v894 = vand.u32 %v891, 16777215
    %v895 = vand.u32 %v892, 16777215
    %vm896 = vcmp.ge.s32.totalorder %v893, 83886
    %vm897 = vcmp.ge.s32.totalorder %v894, 83886
    %vm898 = vcmp.ge.s32.totalorder %v895, 83886
    %v899 = vmul.f32 %v853, 1.0050251
    %v900 = vmul.f32 %v854, 1.0050251
    %v901 = vmul.f32 %v855, 1.0050251
    %v902 = vsel %vm896, %v899, 0.0
    %v903 = vsel %vm897, %v900, 0.0
    %v904 = vsel %vm898, %v901, 0.0
    %v905 = vld [vmem:[%s8] sm:$0x3]
    %v906 = vld [vmem:[%s9] sm:$0x3]
    %908 = vset.pattern.permute.xlu0 0
    %909 = vperm.xlu0 %908, %v906
    %v910 = vpop.permute.xlu0 %909
    %vm912 = vcmask 162816
    %v914 = vsel %vm912, %v905, 0
    %vm916 = vcmask 1043456
    %v918 = vsel %vm916, %v904, 0
    %920 = vmatprep.subr.mxu0 0.0
    %921 = vmatpush1.msra.mxu0 %v902
    %922 = vmatprep.subr.mxu0 0.0
    %923 = vmatpush1.msra.mxu0 %v903
    %924 = vmatprep.subr.mxu0 0.0
    %925 = vmatpush1.msra.mxu0 %v918
    %926 = vmatprep.subr.mxu0 0.0
    %927 = vmatpush1.msra.mxu0 0.0
    %928 = vmatprep.subr.mxu0 0.0
    %929 = vmatpush1.msra.mxu0 0.0
    %930 = vmatprep.subr.mxu0 0.0
    %931 = vmatpush1.msra.mxu0 0.0
    %932 = vmatprep.subr.mxu0 0.0
    %933 = vmatpush1.msra.mxu0 0.0
    %934 = vmatprep.subr.mxu0 0.0
    %935 = vmatpush1.msra.mxu0 0.0
    %936 = vmatprep.subr.mxu0 0.0
    %937 = vmatpush1.msra.mxu0 0.0
    %938 = vmatprep.subr.mxu0 0.0
    %939 = vmatpush1.msra.mxu0 0.0
    %940 = vmatprep.subr.mxu0 0.0
    %941 = vmatpush1.msra.mxu0 0.0
    %942 = vmatprep.subr.mxu0 0.0
    %943 = vmatpush1.msra.mxu0 0.0
    %944 = vmatprep.subr.mxu0 0.0
    %945 = vmatpush1.msra.mxu0 0.0
    %946 = vmatprep.subr.mxu0 0.0
    %947 = vmatpush1.msra.mxu0 0.0
    %948 = vmatprep.subr.mxu0 0.0
    %949 = vmatpush1.msra.mxu0 0.0
    %950 = vmatprep.subr.mxu0 0.0
    %951 = vmatpush1.msra.mxu0 0.0
    %952 = vmatprep.subr.mxu0 0.0
    %953 = vmatpush1.msra.mxu0 0.0
    %954 = vmatprep.subr.mxu0 0.0
    %955 = vmatpush1.msra.mxu0 0.0
    %956 = vmatprep.subr.mxu0 0.0
    %957 = vmatpush1.msra.mxu0 0.0
    %958 = vmatprep.subr.mxu0 0.0
    %959 = vmatpush1.msra.mxu0 0.0
    %960 = vmatprep.subr.mxu0 0.0
    %961 = vmatpush1.msra.mxu0 0.0
    %962 = vmatprep.subr.mxu0 0.0
    %963 = vmatpush1.msra.mxu0 0.0
    %964 = vmatprep.subr.mxu0 0.0
    %965 = vmatpush1.msra.mxu0 0.0
    %966 = vmatprep.subr.mxu0 0.0
    %967 = vmatpush1.msra.mxu0 0.0
    %968 = vmatprep.subr.mxu0 0.0
    %969 = vmatpush1.msra.mxu0 0.0
    %970 = vmatprep.subr.mxu0 0.0
    %971 = vmatpush1.msra.mxu0 0.0
    %972 = vmatprep.subr.mxu0 0.0
    %973 = vmatpush1.msra.mxu0 0.0
    %974 = vmatprep.subr.mxu0 0.0
    %975 = vmatpush1.msra.mxu0 0.0
    %976 = vmatprep.subr.mxu0 0.0
    %977 = vmatpush1.msra.mxu0 0.0
    %978 = vmatprep.subr.mxu0 0.0
    %979 = vmatpush1.msra.mxu0 0.0
    %980 = vmatprep.subr.mxu0 0.0
    %981 = vmatpush1.msra.mxu0 0.0
    %982 = vmatprep.subr.mxu0 0.0
    %983 = vmatpush1.msra.mxu0 0.0
    %984 = vmatprep.mubr.f32.mxu0 0.0
    %985 = vmatmul.mubr.f32.gmra.mrb[0].mxu0 %v914
    %v986 = vpop.f32.mrb[0].mxu0
    %v987 = vadd.f32 %v910, %v986
    %v988 = vpop.f32.mrb[0].mxu0
    %989 = vdwg.mxu0
    %vm990 = vcmp.eq.s32.totalorder %v267, 0
    %vm991 = vcmp.gt.f32.partialorder %v987, 20.0
    %v992 = vmin.f32 %v987, 20.0
    %v993 = vmul.f32 %v992, 1.442695
    %v994 = vpow.pop %v993
    %v995 = vadd.f32 %v994, 1.0
    %v996 = vlog2.pop %v995
    %v997 = vmul.f32 %v996, 0.6931472
    %v998 = vsel %vm991, %v987, %v997
    %v999 = vadd.f32 %v998, 1e-06
    %v1000 = vsel %vm990, %v987, %v999
    %1001 = vst [vmem:[#allocation4] sm:$0x3] %v1000
    // Predicated region
    $region38: #{tpu_custom_call.1} parent=1 // pred_check
      _
    $region39: #{tpu_custom_call.1} parent=1 // pred_check_branch
      %1003 = sbr.rel (0) target = $region41
    $region40: #{tpu_custom_call.1} parent=1 // pred_region
      %s1005 = ssub.s32 32, 32
      %1006 = vsyncadd [#allocation5], %s1005
      %s1008 = sshll.u32 [#allocation4], 4
      %s1009 = int_to_ptr.vmem [resolvable:$true] %s1008
      %1011 = dma.vmem_to_hbm [thread:$0]  %s1009, 32, %s10, [#allocation5]
    $region41: #{tpu_custom_call.1} parent=1 // pred_fallthru
      _
    // Predicated region
    $region42: #{tpu_custom_call.1} parent=1 // pred_check
      _
    $region43: #{tpu_custom_call.1} parent=1 // pred_check_branch
      %1013 = sbr.rel (0) target = $region45
    $region44: #{tpu_custom_call.1} parent=1 // pred_region
      %1014 = dma.done [#allocation5], 32
    $region45: #{tpu_custom_call.1} parent=1 // pred_fallthru
      _
    %1015 = vsyncpa [#allocation5], 1

</llo_original>
